<compile_context>
chip_gen: v5e
topology: v5e:2x2
jax: 0.10.0
libtpu: 0.0.40
codegen_flags: <defaults>
</compile_context>

<pallas_src>
import functools

import jax
import jax.numpy as jnp
from jax import lax
from jax.experimental import pallas as pl
from jax.experimental.pallas import tpu as pltpu

BN_EPS = 1e-5


# ---------------------------------------------------------------------------
# generation-aware sizing helpers
# ---------------------------------------------------------------------------
def _vmem_capacity_bytes():
    try:
        fn = getattr(pltpu, "get_tpu_info", None)
        if fn is not None:
            info = fn()
            for name in ("vmem_capacity_bytes", "vmem_bytes", "vmem_size_bytes"):
                v = getattr(info, name, None)
                if v:
                    return int(v)
    except Exception:
        pass
    return 64 * 1024 * 1024  # conservative fallback (v7x physical VMEM)


def _pick_tile(hw, per_lane_bytes, budget_bytes, cap=None):
    """Largest lane tile whose per-grid-step footprint fits the budget.

    Returns either hw itself (full-extent block, always legal) or a multiple
    of 128 (so partial tiles only appear via cdiv grids + masking)."""
    max_tw = (budget_bytes // max(per_lane_bytes, 1)) // 128 * 128
    if cap is not None:
        max_tw = min(max_tw, max(cap // 128 * 128, 128))
    if max_tw < 128:
        return min(hw, 128)
    if hw <= max_tw:
        return hw                      # full extent -> no tail handling needed
    for tw in range(max_tw, 127, -128):
        if hw % tw == 0:
            return tw                  # exact divisor -> no tail
    return max_tw                      # cdiv grid, masked tail in pass 1


# ---------------------------------------------------------------------------
# Pass 1: per-(batch, channel) partial sum and sum-of-squares over H*W tiles
# ---------------------------------------------------------------------------
def _stats_kernel(x_ref, psum_ref, pssq_ref, *, hw, tw):
    # x_ref:    (1, Cin, TW)   one HW tile of one image (NCHW layout)
    # psum_ref: (1, Cin, 1)    per-batch partial accumulator (resident over j)
    # pssq_ref: (1, Cin, 1)
    j = pl.program_id(1)

    @pl.when(j == 0)
    def _init():
        psum_ref[...] = jnp.zeros_like(psum_ref)
        pssq_ref[...] = jnp.zeros_like(pssq_ref)

    x = x_ref[0].astype(jnp.float32)                        # (Cin, TW)
    if hw % tw != 0:
        # tail tile: zero out lanes beyond the valid extent
        valid = hw - j * tw
        lane = lax.broadcasted_iota(jnp.int32, x.shape, 1)
        x = jnp.where(lane < valid, x, 0.0)
    psum_ref[0] = psum_ref[0] + jnp.sum(x, axis=1, keepdims=True)
    pssq_ref[0] = pssq_ref[0] + jnp.sum(x * x, axis=1, keepdims=True)


# ---------------------------------------------------------------------------
# Pass 2: in-kernel scale/shift from partial sums, BN affine + ReLU + 1x1 conv
# ---------------------------------------------------------------------------
def _transition_kernel(x_ref, psum_ref, pssq_ref, gamma_ref, beta_ref, w_ref,
                       o_ref, *, n_batch, inv_m, eps):
    # x_ref: (1, Cin, TW); psum/pssq: (N, Cin, 1); gamma/beta: (Cin, 1)
    # w_ref: (Cout, Cin) bf16;  o_ref: (1, Cout, TW)
    sums = psum_ref[0]
    ssqs = pssq_ref[0]
    for n in range(1, n_batch):                              # tiny unrolled adds
        sums = sums + psum_ref[n]
        ssqs = ssqs + pssq_ref[n]
    mean = sums * inv_m
    var = jnp.maximum(ssqs * inv_m - mean * mean, 0.0)       # biased, train-mode
    scale = gamma_ref[...] * lax.rsqrt(var + eps)            # rsqrt on EUP slot
    shift = beta_ref[...] - mean * scale

    x = x_ref[0].astype(jnp.float32)                         # (Cin, TW)
    xr = jnp.maximum(x * scale + shift, 0.0)                 # BN + ReLU (f32 VPU)
    y = jnp.dot(w_ref[...], xr.astype(jnp.bfloat16),
                preferred_element_type=jnp.float32)          # MXU, f32 acc
    o_ref[0] = y.astype(o_ref.dtype)


# ---------------------------------------------------------------------------
# Fused single-pass kernel: x read from HBM once, stats + BN + ReLU + conv
# ---------------------------------------------------------------------------
def _fused_kernel(x_ref, gamma_ref, beta_ref, w_ref, o_ref,
                  *, n_batch, inv_m, eps):
    # x_ref: (N, Cin, HW);  o_ref: (N, Cout, HW)
    x0 = x_ref[0].astype(jnp.float32)
    sums = jnp.sum(x0, axis=1, keepdims=True)                # (Cin, 1)
    ssqs = jnp.sum(x0 * x0, axis=1, keepdims=True)
    for n in range(1, n_batch):
        xn = x_ref[n].astype(jnp.float32)
        sums = sums + jnp.sum(xn, axis=1, keepdims=True)
        ssqs = ssqs + jnp.sum(xn * xn, axis=1, keepdims=True)
    mean = sums * inv_m
    var = jnp.maximum(ssqs * inv_m - mean * mean, 0.0)
    scale = gamma_ref[...] * lax.rsqrt(var + eps)
    shift = beta_ref[...] - mean * scale

    w = w_ref[...]
    for n in range(n_batch):
        xr = jnp.maximum(x_ref[n].astype(jnp.float32) * scale + shift, 0.0)
        y = jnp.dot(w, xr.astype(jnp.bfloat16),
                    preferred_element_type=jnp.float32)
        o_ref[n] = y.astype(o_ref.dtype)


# ---------------------------------------------------------------------------
# Wrapper
# ---------------------------------------------------------------------------
def transition_block(x_nchw, gamma, beta, conv_w, *,
                     force_two_pass=False, tile_cap=None):
    """x_nchw: (N, Cin, H, W); conv_w: (Cout, Cin, 1, 1) -> (N, Cout, H, W)."""
    N, Cin, H, W = x_nchw.shape
    Cout = conv_w.shape[0]
    HW = H * W
    M = N * HW
    inv_m = 1.0 / M

    x3 = x_nchw.reshape(N, Cin, HW)                          # free NCHW view
    w = conv_w.reshape(Cout, Cin).astype(jnp.bfloat16)       # bf16 MXU weights
    g = gamma.reshape(Cin, 1).astype(jnp.float32)
    b = beta.reshape(Cin, 1).astype(jnp.float32)

    xb = x3.dtype.itemsize
    ob = xb                                                  # output dtype = input dtype
    vmem_cap = _vmem_capacity_bytes()
    vmem_limit = min(vmem_cap * 3 // 4, 100 * 1024 * 1024)   # ~48 MiB v7x, ~96 MiB v5e/v6e
    tile_budget = int(vmem_limit * 0.7)

    # ---- fused single-pass path: whole x resides in VMEM, read HBM once ----
    fused_bytes = (2 * N * Cin * HW * xb                     # x block (dbl-buffered)
                   + 2 * N * Cout * HW * ob                  # out block
                   + 4 * Cin * HW * 4 + Cout * HW * 4        # in-kernel f32/bf16 temps
                   + (1 << 20))
    if (not force_two_pass) and fused_bytes <= int(0.6 * vmem_limit):
        out3 = pl.pallas_call(
            functools.partial(_fused_kernel, n_batch=N, inv_m=inv_m, eps=BN_EPS),
            out_shape=jax.ShapeDtypeStruct((N, Cout, HW), x3.dtype),
            grid=(1,),
            in_specs=[
                pl.BlockSpec((N, Cin, HW), lambda i: (0, 0, 0)),
                pl.BlockSpec((Cin, 1), lambda i: (0, 0)),
                pl.BlockSpec((Cin, 1), lambda i: (0, 0)),
                pl.BlockSpec((Cout, Cin), lambda i: (0, 0)),
            ],
            out_specs=pl.BlockSpec((N, Cout, HW), lambda i: (0, 0, 0)),
            compiler_params=pltpu.CompilerParams(
                dimension_semantics=("arbitrary",),
                vmem_limit_bytes=vmem_limit),
            cost_estimate=pl.CostEstimate(
                flops=2 * M * Cin * Cout, transcendentals=0,
                bytes_accessed=M * Cin * xb + M * Cout * ob + 2 * Cin * Cout),
        )(x3, g, b, w)
        return out3.reshape(N, Cout, H, W)

    # ---- pass 1: per-batch partial BN statistics (batch axis "parallel") ----
    stats_lane_bytes = (2 * xb + 12) * Cin + 256             # x dbl-buf + f32 temps
    tw1 = _pick_tile(HW, stats_lane_bytes, tile_budget, cap=tile_cap)
    nj1 = pl.cdiv(HW, tw1)
    psum, pssq = pl.pallas_call(
        functools.partial(_stats_kernel, hw=HW, tw=tw1),
        out_shape=(jax.ShapeDtypeStruct((N, Cin, 1), jnp.float32),
                   jax.ShapeDtypeStruct((N, Cin, 1), jnp.float32)),
        grid=(N, nj1),
        in_specs=[pl.BlockSpec((1, Cin, tw1), lambda n, j: (n, 0, j))],
        out_specs=(pl.BlockSpec((1, Cin, 1), lambda n, j: (n, 0, 0)),
                   pl.BlockSpec((1, Cin, 1), lambda n, j: (n, 0, 0))),
        compiler_params=pltpu.CompilerParams(
            dimension_semantics=("parallel", "arbitrary"),
            vmem_limit_bytes=vmem_limit),
        cost_estimate=pl.CostEstimate(
            flops=3 * M * Cin, transcendentals=0,
            bytes_accessed=M * Cin * xb),
    )(x3)

    # ---- pass 2: BN affine + ReLU + 1x1 conv, fully parallel grid ----
    conv_lane_bytes = ((2 * xb + 10) * Cin                   # x dbl-buf + f32/bf16 temps
                       + (2 * ob + 4) * Cout + 256)          # out dbl-buf + f32 result
    tw2 = _pick_tile(HW, conv_lane_bytes, tile_budget, cap=tile_cap)
    nj2 = pl.cdiv(HW, tw2)
    out3 = pl.pallas_call(
        functools.partial(_transition_kernel, n_batch=N, inv_m=inv_m, eps=BN_EPS),
        out_shape=jax.ShapeDtypeStruct((N, Cout, HW), x3.dtype),
        grid=(N, nj2),
        in_specs=[
            pl.BlockSpec((1, Cin, tw2), lambda n, j: (n, 0, j)),
            pl.BlockSpec((N, Cin, 1), lambda n, j: (0, 0, 0)),
            pl.BlockSpec((N, Cin, 1), lambda n, j: (0, 0, 0)),
            pl.BlockSpec((Cin, 1), lambda n, j: (0, 0)),
            pl.BlockSpec((Cin, 1), lambda n, j: (0, 0)),
            pl.BlockSpec((Cout, Cin), lambda n, j: (0, 0)),
        ],
        out_specs=pl.BlockSpec((1, Cout, tw2), lambda n, j: (n, 0, j)),
        compiler_params=pltpu.CompilerParams(
            dimension_semantics=("parallel", "parallel"),
            vmem_limit_bytes=vmem_limit),
        cost_estimate=pl.CostEstimate(
            flops=2 * M * Cin * Cout, transcendentals=0,
            bytes_accessed=M * Cin * xb + M * Cout * ob + 2 * Cin * Cout),
    )(x3, psum, pssq, g, b, w)

    return out3.reshape(N, Cout, H, W)


# ---------------------------------------------------------------------------
# References (plain JAX)
# ---------------------------------------------------------------------------
def _reference_f32(x, gamma, beta, conv_w):
    """PyTorch semantics: train-mode BN -> ReLU -> 1x1 conv, all in f32."""
    N, Cin, H, W = x.shape
    Cout = conv_w.shape[0]
    xf = x.reshape(N, Cin, H * W).astype(jnp.float32)
    mu = jnp.mean(xf, axis=(0, 2), keepdims=True)
    var = jnp.mean((xf - mu) ** 2, axis=(0, 2), keepdims=True)
    xn = (xf - mu) / jnp.sqrt(var + BN_EPS) * gamma.reshape(1, Cin, 1) \
        + beta.reshape(1, Cin, 1)
    xr = jnp.maximum(xn, 0.0)
    wf = conv_w.reshape(Cout, Cin).astype(jnp.float32)
    return jnp.einsum("oc,ncs->nos", wf, xr).reshape(N, Cout, H, W)


def _reference_kernel_path(x, gamma, beta, conv_w):
    """Mirrors the kernel numerics (scale/shift formulation, bf16 MXU operands)."""
    N, Cin, H, W = x.shape
    Cout = conv_w.shape[0]
    M = N * H * W
    xf = x.reshape(N, Cin, H * W).astype(jnp.float32)
    s = jnp.sum(xf, axis=(0, 2)).reshape(Cin, 1)
    ssq = jnp.sum(xf * xf, axis=(0, 2)).reshape(Cin, 1)
    inv_m = jnp.float32(1.0 / M)
    mean = s * inv_m
    var = jnp.maximum(ssq * inv_m - mean * mean, 0.0)
    scale = gamma.reshape(Cin, 1) * lax.rsqrt(var + BN_EPS)
    shift = beta.reshape(Cin, 1) - mean * scale
    xr = jnp.maximum(xf * scale.reshape(1, Cin, 1) + shift.reshape(1, Cin, 1), 0.0)
    wbf = conv_w.reshape(Cout, Cin).astype(jnp.bfloat16).astype(jnp.float32)
    xrbf = xr.astype(jnp.bfloat16).astype(jnp.float32)
    return jnp.einsum("oc,ncs->nos", wbf, xrbf).reshape(N, Cout, H, W)


if __name__ == "__main__":
    key = jax.random.PRNGKey(0)
    kx, kw, kg, kb, kx2 = jax.random.split(key, 5)

    # shapes consistent with the module: batch=2, in_planes=4, out_planes=8
    N, Cin, Cout, H, W = 2, 4, 8, 16, 16
    x = jax.random.normal(kx, (N, Cin, H, W), dtype=jnp.float32)
    conv_w = jax.random.normal(kw, (Cout, Cin, 1, 1), dtype=jnp.float32) * 0.1
    gamma = 1.0 + 0.1 * jax.random.normal(kg, (Cin,), dtype=jnp.float32)
    beta = 0.1 * jax.random.normal(kb, (Cin,), dtype=jnp.float32)

    # case 1: 16x16 spatial -> exercises the fused single-pass VMEM path
    out_fused = transition_block(x, gamma, beta, conv_w)
    jax.block_until_ready(out_fused)
    # case 2: same input, forced through the two-pass (stats + conv) path
    out_two = transition_block(x, gamma, beta, conv_w, force_two_pass=True)
    jax.block_until_ready(out_two)

    ref_bf = _reference_kernel_path(x, gamma, beta, conv_w)
    ref_32 = _reference_f32(x, gamma, beta, conv_w)
    for out in (out_fused, out_two):
        assert jnp.allclose(out, ref_bf, atol=5e-3, rtol=5e-3), "bf16-ref mismatch"
        assert jnp.allclose(out, ref_32, atol=2e-2, rtol=2e-2), "f32-ref mismatch"

    # case 3: 14x14 spatial (HW=196, NOT a multiple of 128) with a 128-lane
    # tile cap -> exercises the cdiv grid + masked-tail stats path
    H2 = W2 = 14
    x2 = jax.random.normal(kx2, (N, Cin, H2, W2), dtype=jnp.float32)
    out_tail = transition_block(x2, gamma, beta, conv_w,
                                force_two_pass=True, tile_cap=128)
    jax.block_until_ready(out_tail)
    ref_bf2 = _reference_kernel_path(x2, gamma, beta, conv_w)
    ref_322 = _reference_f32(x2, gamma, beta, conv_w)
    assert jnp.allclose(out_tail, ref_bf2, atol=5e-3, rtol=5e-3), "tail bf16-ref mismatch"
    assert jnp.allclose(out_tail, ref_322, atol=2e-2, rtol=2e-2), "tail f32-ref mismatch"

    print("KERNEL_OK")
</pallas_src>

<mosaic_0001>
module attributes {stable_mosaic.version = 11 : i64} {
  func.func @_fused_kernel(%arg0: i32, %arg1: memref<2x4x256xf32, #tpu.memory_space<vmem>>, %arg2: memref<4x1xf32, #tpu.memory_space<vmem>>, %arg3: memref<4x1xf32, #tpu.memory_space<vmem>>, %arg4: memref<8x4xbf16, #tpu.memory_space<vmem>>, %arg5: memref<2x8x256xf32, #tpu.memory_space<vmem>>) attributes {dimension_semantics = [#tpu.dimension_semantics<arbitrary>], iteration_bounds = array<i64: 1>, scalar_prefetch = 0 : i64, scratch_operands = 0 : i64, tpu.core_type = #tpu.core_type<tc>, window_params = [{pipeline_mode = #tpu.pipeline_mode<synchronous>, transform_indices = @transform_0, window_bounds = array<i64: 2, 4, 256>}, {pipeline_mode = #tpu.pipeline_mode<synchronous>, transform_indices = @transform_1, window_bounds = array<i64: 4, 1>}, {pipeline_mode = #tpu.pipeline_mode<synchronous>, transform_indices = @transform_2, window_bounds = array<i64: 4, 1>}, {pipeline_mode = #tpu.pipeline_mode<synchronous>, transform_indices = @transform_3, window_bounds = array<i64: 8, 4>}, {pipeline_mode = #tpu.pipeline_mode<synchronous>, transform_indices = @transform_4, window_bounds = array<i64: 2, 8, 256>}]} {
    %c0 = arith.constant 0 : index
    %c0_0 = arith.constant 0 : index
    %c0_1 = arith.constant 0 : index
    %0 = vector.load %arg1[%c0, %c0_0, %c0_1] : memref<2x4x256xf32, #tpu.memory_space<vmem>>, vector<1x4x256xf32>
    %1 = vector.shape_cast %0 : vector<1x4x256xf32> to vector<4x256xf32>
    %cst = arith.constant dense<0.000000e+00> : vector<4xf32>
    %2 = vector.multi_reduction <add>, %1, %cst [1] : vector<4x256xf32> to vector<4xf32>
    %3 = vector.shape_cast %2 : vector<4xf32> to vector<4x1xf32>
    %4 = arith.mulf %1, %1 : vector<4x256xf32>
    %cst_2 = arith.constant dense<0.000000e+00> : vector<4xf32>
    %5 = vector.multi_reduction <add>, %4, %cst_2 [1] : vector<4x256xf32> to vector<4xf32>
    %6 = vector.shape_cast %5 : vector<4xf32> to vector<4x1xf32>
    %c1 = arith.constant 1 : index
    %c0_3 = arith.constant 0 : index
    %c0_4 = arith.constant 0 : index
    %7 = vector.load %arg1[%c1, %c0_3, %c0_4] : memref<2x4x256xf32, #tpu.memory_space<vmem>>, vector<1x4x256xf32>
    %8 = vector.shape_cast %7 : vector<1x4x256xf32> to vector<4x256xf32>
    %cst_5 = arith.constant dense<0.000000e+00> : vector<4xf32>
    %9 = vector.multi_reduction <add>, %8, %cst_5 [1] : vector<4x256xf32> to vector<4xf32>
    %10 = vector.shape_cast %9 : vector<4xf32> to vector<4x1xf32>
    %11 = arith.addf %3, %10 : vector<4x1xf32>
    %12 = arith.mulf %8, %8 : vector<4x256xf32>
    %cst_6 = arith.constant dense<0.000000e+00> : vector<4xf32>
    %13 = vector.multi_reduction <add>, %12, %cst_6 [1] : vector<4x256xf32> to vector<4xf32>
    %14 = vector.shape_cast %13 : vector<4xf32> to vector<4x1xf32>
    %15 = arith.addf %6, %14 : vector<4x1xf32>
    %cst_7 = arith.constant 0.001953125 : f32
    %16 = vector.broadcast %cst_7 : f32 to vector<4x1xf32>
    %17 = arith.mulf %11, %16 : vector<4x1xf32>
    %cst_8 = arith.constant 0.001953125 : f32
    %18 = vector.broadcast %cst_8 : f32 to vector<4x1xf32>
    %19 = arith.mulf %15, %18 : vector<4x1xf32>
    %20 = arith.mulf %17, %17 : vector<4x1xf32>
    %21 = arith.subf %19, %20 : vector<4x1xf32>
    %cst_9 = arith.constant 0.000000e+00 : f32
    %22 = vector.broadcast %cst_9 : f32 to vector<4x1xf32>
    %23 = arith.maximumf %21, %22 : vector<4x1xf32>
    %c0_10 = arith.constant 0 : index
    %c0_11 = arith.constant 0 : index
    %24 = vector.load %arg2[%c0_10, %c0_11] : memref<4x1xf32, #tpu.memory_space<vmem>>, vector<4x1xf32>
    %cst_12 = arith.constant 9.99999974E-6 : f32
    %25 = vector.broadcast %cst_12 : f32 to vector<4x1xf32>
    %26 = arith.addf %23, %25 : vector<4x1xf32>
    %27 = math.rsqrt %26 : vector<4x1xf32>
    %28 = arith.mulf %24, %27 : vector<4x1xf32>
    %c0_13 = arith.constant 0 : index
    %c0_14 = arith.constant 0 : index
    %29 = vector.load %arg3[%c0_13, %c0_14] : memref<4x1xf32, #tpu.memory_space<vmem>>, vector<4x1xf32>
    %30 = arith.mulf %17, %28 : vector<4x1xf32>
    %31 = arith.subf %29, %30 : vector<4x1xf32>
    %c0_15 = arith.constant 0 : index
    %c0_16 = arith.constant 0 : index
    %32 = vector.load %arg4[%c0_15, %c0_16] : memref<8x4xbf16, #tpu.memory_space<vmem>>, vector<8x4xbf16>
    %c0_17 = arith.constant 0 : index
    %c0_18 = arith.constant 0 : index
    %c0_19 = arith.constant 0 : index
    %33 = vector.load %arg1[%c0_17, %c0_18, %c0_19] : memref<2x4x256xf32, #tpu.memory_space<vmem>>, vector<1x4x256xf32>
    %34 = vector.shape_cast %33 : vector<1x4x256xf32> to vector<4x256xf32>
    %35 = vector.broadcast %28 : vector<4x1xf32> to vector<4x256xf32>
    %36 = arith.mulf %34, %35 : vector<4x256xf32>
    %37 = vector.broadcast %31 : vector<4x1xf32> to vector<4x256xf32>
    %38 = arith.addf %36, %37 : vector<4x256xf32>
    %cst_20 = arith.constant 0.000000e+00 : f32
    %39 = vector.broadcast %cst_20 : f32 to vector<4x256xf32>
    %40 = arith.maximumf %38, %39 : vector<4x256xf32>
    %41 = arith.truncf %40 : vector<4x256xf32> to vector<4x256xbf16>
    %cst_21 = arith.constant dense<0.000000e+00> : vector<8x256xf32>
    %42 = tpu.matmul %32, %41, %cst_21 {dimension_numbers = #tpu.dot_dimension_numbers<[1], [0], [0], [1], [0, 0, 1, 1], [], []>} : vector<8x4xbf16>, vector<4x256xbf16>, vector<8x256xf32> -> vector<8x256xf32>
    %c0_22 = arith.constant 0 : index
    %c0_23 = arith.constant 0 : index
    %c0_24 = arith.constant 0 : index
    %43 = vector.load %arg5[%c0_22, %c0_23, %c0_24] : memref<2x8x256xf32, #tpu.memory_space<vmem>>, vector<1x8x256xf32>
    %44 = vector.shape_cast %43 : vector<1x8x256xf32> to vector<8x256xf32>
    %45 = vector.shape_cast %42 : vector<8x256xf32> to vector<1x8x256xf32>
    tpu.vector_store %arg5[%c0_22, %c0_23, %c0_24], %45 {strides = array<i32>} : memref<2x8x256xf32, #tpu.memory_space<vmem>>, vector<1x8x256xf32>,
    %c1_25 = arith.constant 1 : index
    %c0_26 = arith.constant 0 : index
    %c0_27 = arith.constant 0 : index
    %46 = vector.load %arg1[%c1_25, %c0_26, %c0_27] : memref<2x4x256xf32, #tpu.memory_space<vmem>>, vector<1x4x256xf32>
    %47 = vector.shape_cast %46 : vector<1x4x256xf32> to vector<4x256xf32>
    %48 = vector.broadcast %28 : vector<4x1xf32> to vector<4x256xf32>
    %49 = arith.mulf %47, %48 : vector<4x256xf32>
    %50 = vector.broadcast %31 : vector<4x1xf32> to vector<4x256xf32>
    %51 = arith.addf %49, %50 : vector<4x256xf32>
    %cst_28 = arith.constant 0.000000e+00 : f32
    %52 = vector.broadcast %cst_28 : f32 to vector<4x256xf32>
    %53 = arith.maximumf %51, %52 : vector<4x256xf32>
    %54 = arith.truncf %53 : vector<4x256xf32> to vector<4x256xbf16>
    %cst_29 = arith.constant dense<0.000000e+00> : vector<8x256xf32>
    %55 = tpu.matmul %32, %54, %cst_29 {dimension_numbers = #tpu.dot_dimension_numbers<[1], [0], [0], [1], [0, 0, 1, 1], [], []>} : vector<8x4xbf16>, vector<4x256xbf16>, vector<8x256xf32> -> vector<8x256xf32>
    %c1_30 = arith.constant 1 : index
    %c0_31 = arith.constant 0 : index
    %c0_32 = arith.constant 0 : index
    %56 = vector.load %arg5[%c1_30, %c0_31, %c0_32] : memref<2x8x256xf32, #tpu.memory_space<vmem>>, vector<1x8x256xf32>
    %57 = vector.shape_cast %56 : vector<1x8x256xf32> to vector<8x256xf32>
    %58 = vector.shape_cast %55 : vector<8x256xf32> to vector<1x8x256xf32>
    tpu.vector_store %arg5[%c1_30, %c0_31, %c0_32], %58 {strides = array<i32>} : memref<2x8x256xf32, #tpu.memory_space<vmem>>, vector<1x8x256xf32>,
    return
  }
  func.func @transform_0(%arg0: i32) -> (i32, i32, i32) {
    %c0_i32 = arith.constant 0 : i32
    %c0_i32_0 = arith.constant 0 : i32
    %c0_i32_1 = arith.constant 0 : i32
    %c0_i32_2 = arith.constant 0 : i32
    return %c0_i32, %c0_i32_0, %c0_i32_1 : i32, i32, i32
  }
  func.func @transform_1(%arg0: i32) -> (i32, i32) {
    %c0_i32 = arith.constant 0 : i32
    %c0_i32_0 = arith.constant 0 : i32
    %c0_i32_1 = arith.constant 0 : i32
    return %c0_i32, %c0_i32_0 : i32, i32
  }
  func.func @transform_2(%arg0: i32) -> (i32, i32) {
    %c0_i32 = arith.constant 0 : i32
    %c0_i32_0 = arith.constant 0 : i32
    %c0_i32_1 = arith.constant 0 : i32
    return %c0_i32, %c0_i32_0 : i32, i32
  }
  func.func @transform_3(%arg0: i32) -> (i32, i32) {
    %c0_i32 = arith.constant 0 : i32
    %c0_i32_0 = arith.constant 0 : i32
    %c0_i32_1 = arith.constant 0 : i32
    return %c0_i32, %c0_i32_0 : i32, i32
  }
  func.func @transform_4(%arg0: i32) -> (i32, i32, i32) {
    %c0_i32 = arith.constant 0 : i32
    %c0_i32_0 = arith.constant 0 : i32
    %c0_i32_1 = arith.constant 0 : i32
    %c0_i32_2 = arith.constant 0 : i32
    return %c0_i32, %c0_i32_0, %c0_i32_1 : i32, i32, i32
  }
}

</mosaic_0001>

<llo_original>
// kernel: tpu_custom_call.1
$region0: #{tpu_custom_call.1}
  #allocation0 [shape = 'u32[]', space=smem, size = 0x4, offset = 0x4, fixed_abs, tag = 'smem constant byte address 0x4 - core index']
  #allocation1 [shape = 'u32[72,128]{1,0:T(1,128)}', space=vmem, size = 0x9000, scoped, tag = 'internal scratch']
  %s0 = inlined_call_operand.hbm [shape: f32[2,4,256], index: 0, kind: input, shape index: {}]
  %s1 = inlined_call_operand.vmem [shape: f32[4,1], index: 1, kind: input, shape index: {}]
  %s2 = inlined_call_operand.vmem [shape: f32[4,1], index: 2, kind: input, shape index: {}]
  %s3 = inlined_call_operand.vmem [shape: bf16[8,4], index: 3, kind: input, shape index: {}]
  %s4 = inlined_call_operand.hbm [shape: f32[2,8,256], index: 4, kind: output, shape index: {}]
  %s5 = sld [smem:[#allocation0]]
  $region30: #{tpu_custom_call.1} parent=0
    _
  %s7 = ssub.s32 1, %s5
  %s8 = scalar_select 0, %s7, %s5
  $region1: #{tpu_custom_call.1} parent=0
    #allocation2 [shape = 'u8[8192]{0}', space=vmem, size = 0x2000, scoped, tag = 'input window, operand 0, single buffered']
    #allocation3 [shape = 's32[1]{0}', space=sflag, size = 0x4, scoped, tag = 'scoped memory for tpu_custom_call.1']
    #allocation4 [shape = 's32[1]{0}', space=sflag, size = 0x4, scoped, tag = 'scoped memory for tpu_custom_call.1']
    #allocation5 [shape = 'u8[16384]{0}', space=vmem, size = 0x4000, scoped, tag = 'output window, operand 0, single buffered']
    %9 = vsyncpa [#allocation3], 0
    %10 = vsyncpa [#allocation4], 0
    // Predicated region
    $region2: #{tpu_custom_call.1} parent=1 // pred_check
      _
    $region3: #{tpu_custom_call.1} parent=1 // pred_check_branch
      %12 = sbr.rel (0) target = $region5
    $region4: #{tpu_custom_call.1} parent=1 // pred_region
      %14 = vsyncadd [#allocation3], 0
      %s15 = sshll.u32 %s0, 4
      %s16 = int_to_ptr.hbm [resolvable:$true] %s15
      %s17 = sshll.u32 [#allocation2], 4
      %s18 = int_to_ptr.vmem [resolvable:$true] %s17
      %23 = dma.hbm_to_vmem [thread:$0]  %s16, 256, %s18, [#allocation3], 128, 128, 8
    $region5: #{tpu_custom_call.1} parent=1 // pred_fallthru
      _
    // Predicated region
    $region6: #{tpu_custom_call.1} parent=1 // pred_check
      _
    $region7: #{tpu_custom_call.1} parent=1 // pred_check_branch
      %25 = sbr.rel (0) target = $region9
    $region8: #{tpu_custom_call.1} parent=1 // pred_region
      _
    $region9: #{tpu_custom_call.1} parent=1 // pred_fallthru
      _
    // Predicated region
    $region10: #{tpu_custom_call.1} parent=1 // pred_check
      _
    $region11: #{tpu_custom_call.1} parent=1 // pred_check_branch
      %27 = sbr.rel (0) target = $region13
    $region12: #{tpu_custom_call.1} parent=1 // pred_region
      _
    $region13: #{tpu_custom_call.1} parent=1 // pred_fallthru
      _
    // Predicated region
    $region14: #{tpu_custom_call.1} parent=1 // pred_check
      _
    $region15: #{tpu_custom_call.1} parent=1 // pred_check_branch
      %29 = sbr.rel (0) target = $region17
    $region16: #{tpu_custom_call.1} parent=1 // pred_region
      _
    $region17: #{tpu_custom_call.1} parent=1 // pred_fallthru
      _
    // Predicated region
    $region18: #{tpu_custom_call.1} parent=1 // pred_check
      _
    $region19: #{tpu_custom_call.1} parent=1 // pred_check_branch
      %31 = sbr.rel (0) target = $region21
    $region20: #{tpu_custom_call.1} parent=1 // pred_region
      %33 = dma.done [#allocation3], 256
    $region21: #{tpu_custom_call.1} parent=1 // pred_fallthru
      _
    %v35 = vld [vmem:[#allocation2] sm:$0xff]
    %37 = vst [vmem:[#allocation1] ss:$2 sm:$0xff] %v35
    %v38 = vld.sshfl [vmem:[#allocation1] sm:$0xff pattern:$0x75316420]
    %v39 = vld.sshfl [vmem:[#allocation1 + $0x8] sm:$0xff pattern:$0x75316420]
    %vm42 = vcmask 1043456
    %v43 = vsel %vm42, %v38, 0.0
    %v44 = vsel %vm42, %v39, 0.0
    %v45 = vadd.f32 %v43, %v44
    %46 = vadd.xlane.f32.xlu0 %v45
    %v47 = vpop.xlane.xlu0 %46
    %v48 = vmul.f32 %v35, %v35
    %50 = vst [vmem:[#allocation1] ss:$2 sm:$0xff] %v48
    %v51 = vld.sshfl [vmem:[#allocation1] sm:$0xff pattern:$0x75316420]
    %v52 = vld.sshfl [vmem:[#allocation1 + $0x8] sm:$0xff pattern:$0x75316420]
    %v55 = vsel %vm42, %v51, 0.0
    %v56 = vsel %vm42, %v52, 0.0
    %v57 = vadd.f32 %v55, %v56
    %58 = vadd.xlane.f32.xlu0 %v57
    %v59 = vpop.xlane.xlu0 %58
    %s60 = scalar_lea.vmem [#allocation2], 8
    %v61 = vld [vmem:[%s60] sm:$0xff]
    %63 = vst [vmem:[#allocation1] ss:$2 sm:$0xff] %v61
    %v64 = vld.sshfl [vmem:[#allocation1] sm:$0xff pattern:$0x75316420]
    %v65 = vld.sshfl [vmem:[#allocation1 + $0x8] sm:$0xff pattern:$0x75316420]
    %v68 = vsel %vm42, %v64, 0.0
    %v69 = vsel %vm42, %v65, 0.0
    %v70 = vadd.f32 %v68, %v69
    %71 = vadd.xlane.f32.xlu0 %v70
    %v72 = vpop.xlane.xlu0 %71
    %v73 = vadd.f32 %v47, %v72
    %v74 = vmul.f32 %v61, %v61
    %76 = vst [vmem:[#allocation1] ss:$2 sm:$0xff] %v74
    %v77 = vld.sshfl [vmem:[#allocation1] sm:$0xff pattern:$0x75316420]
    %v78 = vld.sshfl [vmem:[#allocation1 + $0x8] sm:$0xff pattern:$0x75316420]
    %v81 = vsel %vm42, %v77, 0.0
    %v82 = vsel %vm42, %v78, 0.0
    %v83 = vadd.f32 %v81, %v82
    %84 = vadd.xlane.f32.xlu0 %v83
    %v85 = vpop.xlane.xlu0 %84
    %v86 = vadd.f32 %v59, %v85
    %v87 = vmul.f32 %v73, 0.001953125
    %v88 = vmul.f32 %v86, 0.001953125
    %v89 = vmul.f32 %v87, %v87
    %v90 = vsub.f32 %v88, %v89
    %v91 = vmax.f32 %v90, 0.0
    %v92 = vld [vmem:[%s1] sm:$0xf]
    %v93 = vadd.f32 %v91, 1e-05
    %v94 = vrsqrt.pop %v93
    %v95 = vmul.f32 %v94, %v93
    %v96 = vmul.f32 %v95, %v94
    %v97 = vmul.f32 0.5, %v96
    %v98 = vsub.f32 1.5, %v97
    %v99 = vmul.f32 %v94, %v98
    %vm100 = vweird.f32 %v93
    %vm101 = vweird.f32 %v94
    %vm102 = vmor %vm100, %vm101
    %v103 = vsel %vm102, %v94, %v99
    %v104 = vmul.f32 %v92, %v103
    %v105 = vld [vmem:[%s2] sm:$0xf]
    %v106 = vmul.f32 %v87, %v104
    %v107 = vsub.f32 %v105, %v106
    %v108 = vld [vmem:[%s3] sm:$0xf]
    %110 = vset.pattern.permute.xlu0 0
    %111 = vperm.xlu0 %110, %v104
    %v112 = vpop.permute.xlu0 %111
    %v114 = vunpack.c.l.s4 839922192
    %v115 = vunpack.c.0.s8 %v114
    %v116 = vperm.slane %v112, %v115
    %v118 = vmul.f32 %v35, %v116
    %120 = vset.pattern.permute.xlu0 0
    %121 = vperm.xlu0 %120, %v107
    %v122 = vpop.permute.xlu0 %121
    %v124 = vunpack.c.l.s4 839922192
    %v125 = vunpack.c.0.s8 %v124
    %v126 = vperm.slane %v122, %v125
    %v128 = vadd.f32 %v118, %v126
    %v129 = vmax.f32 %v128, 0.0
    %131 = vst [vmem:[#allocation1] ss:$2 sm:$0xff] %v129
    %v132 = vld.sshfl [vmem:[#allocation1] sm:$0xff pattern:$0x75316420]
    %v133 = vld.sshfl [vmem:[#allocation1 + $0x8] sm:$0xff pattern:$0x75316420]
    %v136 = vpack.c.bf16 %v132, %v132
    %v137 = vpack.c.bf16 %v133, %v133
    %vm138 = vcmask 31744
    %v140 = vsel %vm138, %v108, 0
    %vm142 = vcmask 1041408
    %v144 = vsel %vm142, %v136, 0
    %v147 = vsel %vm142, %v137, 0
    %149 = vmatpush.bf16.msra.mxu0 0
    %150 = vmatpush.bf16.msra.mxu0 0
    %151 = vmatpush.bf16.msra.mxu0 0
    %152 = vmatpush.bf16.msra.mxu0 0
    %153 = vmatpush.bf16.msra.mxu0 0
    %154 = vmatpush.bf16.msra.mxu0 0
    %155 = vmatpush.bf16.msra.mxu0 0
    %156 = vmatpush.bf16.msra.mxu0 %v144
    %157 = vmatmul.bf16.gmra.mxu0 %v140
    %v158 = vpop.f32.mrf.mxu0
    %v159 = vadd.f32 0.0, %v158
    %v160 = vpop.f32.mrf.mxu0
    %161 = vdwg.mxu0
    %162 = vmatpush.bf16.msra.mxu0 0
    %163 = vmatpush.bf16.msra.mxu0 0
    %164 = vmatpush.bf16.msra.mxu0 0
    %165 = vmatpush.bf16.msra.mxu0 0
    %166 = vmatpush.bf16.msra.mxu0 0
    %167 = vmatpush.bf16.msra.mxu0 0
    %168 = vmatpush.bf16.msra.mxu0 0
    %169 = vmatpush.bf16.msra.mxu0 %v147
    %170 = vmatmul.bf16.gmra.mxu0 %v140
    %v171 = vpop.f32.mrf.mxu0
    %v172 = vadd.f32 0.0, %v171
    %v173 = vpop.f32.mrf.mxu0
    %174 = vdwg.mxu0
    %175 = vst [vmem:[#allocation5] sm:$0xff] %v159
    %176 = vst [vmem:[#allocation5 + $0x8] sm:$0xff] %v172
    %v177 = vld [vmem:[%s60] sm:$0xff]
    %v178 = vmul.f32 %v177, %v116
    %v179 = vadd.f32 %v178, %v126
    %v180 = vmax.f32 %v179, 0.0
    %182 = vst [vmem:[#allocation1] ss:$2 sm:$0xff] %v180
    %v183 = vld.sshfl [vmem:[#allocation1] sm:$0xff pattern:$0x75316420]
    %v184 = vld.sshfl [vmem:[#allocation1 + $0x8] sm:$0xff pattern:$0x75316420]
    %v187 = vpack.c.bf16 %v183, %v183
    %v188 = vpack.c.bf16 %v184, %v184
    %v190 = vsel %vm142, %v187, 0
    %v193 = vsel %vm142, %v188, 0
    %195 = vmatpush.bf16.msra.mxu0 0
    %196 = vmatpush.bf16.msra.mxu0 0
    %197 = vmatpush.bf16.msra.mxu0 0
    %198 = vmatpush.bf16.msra.mxu0 0
    %199 = vmatpush.bf16.msra.mxu0 0
    %200 = vmatpush.bf16.msra.mxu0 0
    %201 = vmatpush.bf16.msra.mxu0 0
    %202 = vmatpush.bf16.msra.mxu0 %v190
    %203 = vmatmul.bf16.gmra.mxu0 %v140
    %v204 = vpop.f32.mrf.mxu0
    %v205 = vadd.f32 0.0, %v204
    %v206 = vpop.f32.mrf.mxu0
    %207 = vdwg.mxu0
    %208 = vmatpush.bf16.msra.mxu0 0
    %209 = vmatpush.bf16.msra.mxu0 0
    %210 = vmatpush.bf16.msra.mxu0 0
    %211 = vmatpush.bf16.msra.mxu0 0
    %212 = vmatpush.bf16.msra.mxu0 0
    %213 = vmatpush.bf16.msra.mxu0 0
    %214 = vmatpush.bf16.msra.mxu0 0
    %215 = vmatpush.bf16.msra.mxu0 %v193
    %216 = vmatmul.bf16.gmra.mxu0 %v140
    %v217 = vpop.f32.mrf.mxu0
    %v218 = vadd.f32 0.0, %v217
    %v219 = vpop.f32.mrf.mxu0
    %220 = vdwg.mxu0
    %s221 = scalar_lea.vmem [#allocation5], 16
    %222 = vst [vmem:[%s221] sm:$0xff] %v205
    %223 = vst [vmem:[%s221 + $0x8] sm:$0xff] %v218
    // Predicated region
    $region22: #{tpu_custom_call.1} parent=1 // pred_check
      _
    $region23: #{tpu_custom_call.1} parent=1 // pred_check_branch
      %225 = sbr.rel (0) target = $region25
    $region24: #{tpu_custom_call.1} parent=1 // pred_region
      %227 = vsyncadd [#allocation4], 0
      %s228 = sshll.u32 [#allocation5], 4
      %s229 = int_to_ptr.vmem [resolvable:$true] %s228
      %s230 = sshll.u32 %s4, 4
      %s231 = int_to_ptr.hbm [resolvable:$true] %s230
      %236 = dma.vmem_to_hbm [thread:$0]  %s229, 512, %s231, [#allocation4], 256, 256, 16
    $region25: #{tpu_custom_call.1} parent=1 // pred_fallthru
      _
    // Predicated region
    $region26: #{tpu_custom_call.1} parent=1 // pred_check
      _
    $region27: #{tpu_custom_call.1} parent=1 // pred_check_branch
      %238 = sbr.rel (0) target = $region29
    $region28: #{tpu_custom_call.1} parent=1 // pred_region
      %240 = dma.done [#allocation4], 512
    $region29: #{tpu_custom_call.1} parent=1 // pred_fallthru
      _
    %241 = vsyncpa [#allocation3], 1
    %242 = vsyncpa [#allocation4], 1

</llo_original>
